<compile_context>
chip_gen: v6e
topology: v6e:2x2x1
jax: 0.10.0
libtpu: 0.0.40
codegen_flags: <defaults>
</compile_context>

<pallas_src>
import functools

import jax
import jax.numpy as jnp
from jax import lax
from jax.experimental import pallas as pl
from jax.experimental.pallas import tpu as pltpu
import numpy as np


def mapping_kernel(z_ref, w_ref, b_ref, out_ref, *, num_layers, eps):
    # z_ref: (bm, D_in) f32
    # w_ref: (L, D_in, D_out) bf16, pre-transposed, wscale folded in
    # b_ref: (L, 1, D_out)   bf16, lr_mul folded in
    x = z_ref[...].astype(jnp.float32)

    # PixelNormLayer: x / sqrt(mean(x^2, dim=1, keepdim=True) + eps)  (f32 for accuracy)
    ms = jnp.mean(x * x, axis=1, keepdims=True)
    x = (x * lax.rsqrt(ms + eps)).astype(jnp.bfloat16)

    # Fully unrolled layer chain: static ref indices -> zero-cost views, full LLO
    # scheduler visibility across all tiny matmuls.
    for l in range(num_layers):
        # MXU matmul, bf16 x bf16 -> f32 accumulation.
        y = jnp.dot(x, w_ref[l], preferred_element_type=jnp.float32)
        # Elementwise tail in bf16: one cast, bias add, max-form LeakyReLU(0.2).
        y = y.astype(jnp.bfloat16) + b_ref[l]          # (bm,D_out) + (1,D_out)
        x = jnp.maximum(y, 0.2 * y)                    # lrelu, stays bf16 for next dot

    out_ref[...] = x.astype(out_ref.dtype)


def prepare_mapping_params(weights, biases, *, gain=np.sqrt(2.0), lr_mul=0.01):
    """One-time parameter folding (cache the result; do NOT call per forward).

    weights: (L, D_out, D_in) PyTorch nn.Linear layout; biases: (L, D_out).
    Returns:
      w_t_scaled: (L, D_in, D_out) bf16, = W^T * (gain/sqrt(fan_in) * lr_mul)   [exact fold]
      b_scaled:   (L, 1, D_out)    bf16, = b * lr_mul                           [exact fold]
    Assumes all layers share the same in/out dim (the module's default 512 config).
    """
    L, d_out, d_in = weights.shape
    fan_in = d_in  # kernel_size=1 in WScaleLayer
    scale = float(gain / np.sqrt(fan_in) * lr_mul)
    w_t = (jnp.transpose(weights, (0, 2, 1)).astype(jnp.float32) * scale)
    w_t = w_t.astype(jnp.bfloat16)
    b = (biases.astype(jnp.float32) * float(lr_mul)).reshape(L, 1, d_out)
    b = b.astype(jnp.bfloat16)
    return w_t, b


def _round_up(x, m):
    return ((x + m - 1) // m) * m


def _choose_batch_tiling(batch, batch_block):
    """Pick (bm, padded_batch). bm is a multiple of 8; grid = padded_batch // bm."""
    cap = max(8, (batch_block // 8) * 8)
    if batch <= cap:
        bm = _round_up(batch, 8)
        return bm, bm
    # Exact multiple-of-8 divisors of batch up to the cap; prefer an even grid length so
    # the 'parallel' batch axis splits evenly across the two v7x TensorCores.
    divisors = [m for m in range(8, cap + 1, 8) if batch % m == 0]
    if divisors:
        even = [m for m in divisors if (batch // m) % 2 == 0]
        bm = max(even) if even else max(divisors)
        return bm, batch
    # No clean divisor: pad the batch up to a tile boundary instead of collapsing to a
    # single monolithic block (keeps pipelining + core split + dense (8,128) layouts).
    return cap, _round_up(batch, cap)


# Constant-index-map inputs are single-buffered (double-buffering them is pure VMEM waste).
_HAS_BUFFERED = hasattr(pl, "Buffered")


def _const_spec(shape):
    idx = lambda i: (0,) * len(shape)
    if _HAS_BUFFERED:
        return pl.BlockSpec(shape, idx, pipeline_mode=pl.Buffered(1))
    return pl.BlockSpec(shape, idx)


def mapping_forward(z, w_t_scaled, b_scaled, *, eps=1e-8, batch_block=512):
    """z: (B, D_in) f32; w_t_scaled: (L, D_in, D_out) bf16; b_scaled: (L, 1, D_out) bf16."""
    B, D = z.shape
    L, D_in, D_out = w_t_scaled.shape
    assert D == D_in, (D, D_in)

    bm, B_pad = _choose_batch_tiling(B, batch_block)
    if B_pad != B:
        # Zero rows are safe: pixel-norm eps keeps them finite; padded outputs are dropped.
        z = jnp.pad(z, ((0, B_pad - B), (0, 0)))
    grid = (B_pad // bm,)

    kernel = functools.partial(mapping_kernel, num_layers=L, eps=float(eps))

    # Explicit VMEM budget: single-buffered weight/bias slabs + double-buffered z/out
    # blocks + live bf16/f32 intermediates, with ~2x headroom.
    w_bytes = L * D_in * D_out * 2
    b_bytes = L * D_out * 2
    io_bytes = 2 * bm * (D_in + D_out) * 4
    live_bytes = 6 * bm * max(D_in, D_out) * 4
    vmem_limit = int(min(64 << 20,
                         max(16 << 20, 2 * (w_bytes + b_bytes + io_bytes + live_bytes))))

    out = pl.pallas_call(
        kernel,
        out_shape=jax.ShapeDtypeStruct((B_pad, D_out), jnp.float32),
        grid=grid,
        in_specs=[
            pl.BlockSpec((bm, D_in), lambda i: (i, 0)),
            _const_spec((L, D_in, D_out)),
            _const_spec((L, 1, D_out)),
        ],
        out_specs=pl.BlockSpec((bm, D_out), lambda i: (i, 0)),
        compiler_params=pltpu.CompilerParams(
            dimension_semantics=("parallel",),
            vmem_limit_bytes=vmem_limit,
        ),
    )(z, w_t_scaled, b_scaled)

    if B_pad != B:
        out = out[:B]
    return out


def mapping_reference(z, weights, biases, *, gain=np.sqrt(2.0), lr_mul=0.01, eps=1e-8):
    """Pure-JAX f32 reference mirroring the PyTorch forward exactly."""
    fan_in = weights.shape[2]
    scale = gain / np.sqrt(fan_in) * lr_mul
    x = z / jnp.sqrt(jnp.mean(z * z, axis=1, keepdims=True) + eps)
    for i in range(weights.shape[0]):
        x = x @ weights[i].T                # nn.Linear(bias=False)
        x = x * scale + biases[i] * lr_mul  # WScaleLayer
        x = jnp.where(x >= 0, x, 0.2 * x)   # LeakyReLU(0.2)
    return x


if __name__ == "__main__":
    # Small shapes consistent with the module: batch=8, dims=128, 8 layers.
    B, D, L = 8, 128, 8

    key = jax.random.PRNGKey(0)
    kz, kw, kb = jax.random.split(key, 3)
    z = jax.random.normal(kz, (B, D), dtype=jnp.float32)

    # Weight magnitude chosen so activations stay O(0.1-1) through the lr_mul=0.01
    # wscale, keeping the numerical comparison meaningful for untrained weights.
    scale = float(np.sqrt(2.0) / np.sqrt(D) * 0.01)
    w_std = 1.0 / (scale * np.sqrt(D))
    weights = jax.random.normal(kw, (L, D, D), dtype=jnp.float32) * w_std
    biases = jax.random.normal(kb, (L, D), dtype=jnp.float32) * 0.1

    # One-time parameter folding (cached as "model state").
    w_prep, b_prep = prepare_mapping_params(weights, biases)

    fwd = jax.jit(mapping_forward)
    out = jax.block_until_ready(fwd(z, w_prep, b_prep))

    ref = mapping_reference(z, weights, biases)
    # Tolerance accounts for the bf16 weight feed + bf16 elementwise tail (math is
    # otherwise exact; matmuls accumulate in f32).
    np.testing.assert_allclose(np.asarray(out), np.asarray(ref),
                               rtol=5e-2, atol=3e-2)

    print("KERNEL_OK")
</pallas_src>

<mosaic_0001>
module attributes {stable_mosaic.version = 11 : i64} {
  func.func @mapping_kernel(%arg0: i32, %arg1: memref<8x128xf32, #tpu.memory_space<vmem>>, %arg2: memref<8x128x128xbf16, #tpu.memory_space<vmem>>, %arg3: memref<8x1x128xbf16, #tpu.memory_space<vmem>>, %arg4: memref<8x128xf32, #tpu.memory_space<vmem>>) attributes {dimension_semantics = [#tpu.dimension_semantics<parallel>], iteration_bounds = array<i64: 1>, scalar_prefetch = 0 : i64, scratch_operands = 0 : i64, tpu.core_type = #tpu.core_type<tc>, window_params = [{transform_indices = @transform_0, window_bounds = array<i64: 8, 128>}, {pipeline_mode = #tpu.pipeline_mode<synchronous>, transform_indices = @transform_1, window_bounds = array<i64: 8, 128, 128>}, {pipeline_mode = #tpu.pipeline_mode<synchronous>, transform_indices = @transform_2, window_bounds = array<i64: 8, 1, 128>}, {transform_indices = @transform_3, window_bounds = array<i64: 8, 128>}]} {
    %c0 = arith.constant 0 : index
    %c0_0 = arith.constant 0 : index
    %0 = vector.load %arg1[%c0, %c0_0] : memref<8x128xf32, #tpu.memory_space<vmem>>, vector<8x128xf32>
    %1 = arith.mulf %0, %0 : vector<8x128xf32>
    %cst = arith.constant dense<0.000000e+00> : vector<8xf32>
    %2 = vector.multi_reduction <add>, %1, %cst [1] : vector<8x128xf32> to vector<8xf32>
    %3 = vector.shape_cast %2 : vector<8xf32> to vector<8x1xf32>
    %cst_1 = arith.constant 1.280000e+02 : f32
    %4 = vector.broadcast %cst_1 : f32 to vector<8x1xf32>
    %5 = arith.divf %3, %4 : vector<8x1xf32>
    %cst_2 = arith.constant 9.99999993E-9 : f32
    %6 = vector.broadcast %cst_2 : f32 to vector<8x1xf32>
    %7 = arith.addf %5, %6 : vector<8x1xf32>
    %8 = math.rsqrt %7 : vector<8x1xf32>
    %9 = vector.broadcast %8 : vector<8x1xf32> to vector<8x128xf32>
    %10 = arith.mulf %0, %9 : vector<8x128xf32>
    %11 = arith.truncf %10 : vector<8x128xf32> to vector<8x128xbf16>
    %c0_3 = arith.constant 0 : index
    %c0_4 = arith.constant 0 : index
    %c0_5 = arith.constant 0 : index
    %12 = vector.load %arg2[%c0_3, %c0_4, %c0_5] : memref<8x128x128xbf16, #tpu.memory_space<vmem>>, vector<1x128x128xbf16>
    %13 = vector.shape_cast %12 : vector<1x128x128xbf16> to vector<128x128xbf16>
    %cst_6 = arith.constant dense<0.000000e+00> : vector<8x128xf32>
    %14 = tpu.matmul %11, %13, %cst_6 {dimension_numbers = #tpu.dot_dimension_numbers<[1], [0], [0], [1], [0, 0, 1, 1], [], []>} : vector<8x128xbf16>, vector<128x128xbf16>, vector<8x128xf32> -> vector<8x128xf32>
    %15 = arith.truncf %14 : vector<8x128xf32> to vector<8x128xbf16>
    %c0_7 = arith.constant 0 : index
    %c0_8 = arith.constant 0 : index
    %c0_9 = arith.constant 0 : index
    %16 = vector.load %arg3[%c0_7, %c0_8, %c0_9] : memref<8x1x128xbf16, #tpu.memory_space<vmem>>, vector<1x1x128xbf16>
    %17 = vector.shape_cast %16 : vector<1x1x128xbf16> to vector<1x128xbf16>
    %18 = vector.broadcast %17 : vector<1x128xbf16> to vector<8x128xbf16>
    %19 = arith.addf %15, %18 : vector<8x128xbf16>
    %cst_10 = arith.constant 2.001950e-01 : bf16
    %20 = vector.broadcast %cst_10 : bf16 to vector<8x128xbf16>
    %21 = arith.mulf %20, %19 : vector<8x128xbf16>
    %22 = arith.maximumf %19, %21 : vector<8x128xbf16>
    %c1 = arith.constant 1 : index
    %c0_11 = arith.constant 0 : index
    %c0_12 = arith.constant 0 : index
    %23 = vector.load %arg2[%c1, %c0_11, %c0_12] : memref<8x128x128xbf16, #tpu.memory_space<vmem>>, vector<1x128x128xbf16>
    %24 = vector.shape_cast %23 : vector<1x128x128xbf16> to vector<128x128xbf16>
    %cst_13 = arith.constant dense<0.000000e+00> : vector<8x128xf32>
    %25 = tpu.matmul %22, %24, %cst_13 {dimension_numbers = #tpu.dot_dimension_numbers<[1], [0], [0], [1], [0, 0, 1, 1], [], []>} : vector<8x128xbf16>, vector<128x128xbf16>, vector<8x128xf32> -> vector<8x128xf32>
    %26 = arith.truncf %25 : vector<8x128xf32> to vector<8x128xbf16>
    %c1_14 = arith.constant 1 : index
    %c0_15 = arith.constant 0 : index
    %c0_16 = arith.constant 0 : index
    %27 = vector.load %arg3[%c1_14, %c0_15, %c0_16] : memref<8x1x128xbf16, #tpu.memory_space<vmem>>, vector<1x1x128xbf16>
    %28 = vector.shape_cast %27 : vector<1x1x128xbf16> to vector<1x128xbf16>
    %29 = vector.broadcast %28 : vector<1x128xbf16> to vector<8x128xbf16>
    %30 = arith.addf %26, %29 : vector<8x128xbf16>
    %cst_17 = arith.constant 2.001950e-01 : bf16
    %31 = vector.broadcast %cst_17 : bf16 to vector<8x128xbf16>
    %32 = arith.mulf %31, %30 : vector<8x128xbf16>
    %33 = arith.maximumf %30, %32 : vector<8x128xbf16>
    %c2 = arith.constant 2 : index
    %c0_18 = arith.constant 0 : index
    %c0_19 = arith.constant 0 : index
    %34 = vector.load %arg2[%c2, %c0_18, %c0_19] : memref<8x128x128xbf16, #tpu.memory_space<vmem>>, vector<1x128x128xbf16>
    %35 = vector.shape_cast %34 : vector<1x128x128xbf16> to vector<128x128xbf16>
    %cst_20 = arith.constant dense<0.000000e+00> : vector<8x128xf32>
    %36 = tpu.matmul %33, %35, %cst_20 {dimension_numbers = #tpu.dot_dimension_numbers<[1], [0], [0], [1], [0, 0, 1, 1], [], []>} : vector<8x128xbf16>, vector<128x128xbf16>, vector<8x128xf32> -> vector<8x128xf32>
    %37 = arith.truncf %36 : vector<8x128xf32> to vector<8x128xbf16>
    %c2_21 = arith.constant 2 : index
    %c0_22 = arith.constant 0 : index
    %c0_23 = arith.constant 0 : index
    %38 = vector.load %arg3[%c2_21, %c0_22, %c0_23] : memref<8x1x128xbf16, #tpu.memory_space<vmem>>, vector<1x1x128xbf16>
    %39 = vector.shape_cast %38 : vector<1x1x128xbf16> to vector<1x128xbf16>
    %40 = vector.broadcast %39 : vector<1x128xbf16> to vector<8x128xbf16>
    %41 = arith.addf %37, %40 : vector<8x128xbf16>
    %cst_24 = arith.constant 2.001950e-01 : bf16
    %42 = vector.broadcast %cst_24 : bf16 to vector<8x128xbf16>
    %43 = arith.mulf %42, %41 : vector<8x128xbf16>
    %44 = arith.maximumf %41, %43 : vector<8x128xbf16>
    %c3 = arith.constant 3 : index
    %c0_25 = arith.constant 0 : index
    %c0_26 = arith.constant 0 : index
    %45 = vector.load %arg2[%c3, %c0_25, %c0_26] : memref<8x128x128xbf16, #tpu.memory_space<vmem>>, vector<1x128x128xbf16>
    %46 = vector.shape_cast %45 : vector<1x128x128xbf16> to vector<128x128xbf16>
    %cst_27 = arith.constant dense<0.000000e+00> : vector<8x128xf32>
    %47 = tpu.matmul %44, %46, %cst_27 {dimension_numbers = #tpu.dot_dimension_numbers<[1], [0], [0], [1], [0, 0, 1, 1], [], []>} : vector<8x128xbf16>, vector<128x128xbf16>, vector<8x128xf32> -> vector<8x128xf32>
    %48 = arith.truncf %47 : vector<8x128xf32> to vector<8x128xbf16>
    %c3_28 = arith.constant 3 : index
    %c0_29 = arith.constant 0 : index
    %c0_30 = arith.constant 0 : index
    %49 = vector.load %arg3[%c3_28, %c0_29, %c0_30] : memref<8x1x128xbf16, #tpu.memory_space<vmem>>, vector<1x1x128xbf16>
    %50 = vector.shape_cast %49 : vector<1x1x128xbf16> to vector<1x128xbf16>
    %51 = vector.broadcast %50 : vector<1x128xbf16> to vector<8x128xbf16>
    %52 = arith.addf %48, %51 : vector<8x128xbf16>
    %cst_31 = arith.constant 2.001950e-01 : bf16
    %53 = vector.broadcast %cst_31 : bf16 to vector<8x128xbf16>
    %54 = arith.mulf %53, %52 : vector<8x128xbf16>
    %55 = arith.maximumf %52, %54 : vector<8x128xbf16>
    %c4 = arith.constant 4 : index
    %c0_32 = arith.constant 0 : index
    %c0_33 = arith.constant 0 : index
    %56 = vector.load %arg2[%c4, %c0_32, %c0_33] : memref<8x128x128xbf16, #tpu.memory_space<vmem>>, vector<1x128x128xbf16>
    %57 = vector.shape_cast %56 : vector<1x128x128xbf16> to vector<128x128xbf16>
    %cst_34 = arith.constant dense<0.000000e+00> : vector<8x128xf32>
    %58 = tpu.matmul %55, %57, %cst_34 {dimension_numbers = #tpu.dot_dimension_numbers<[1], [0], [0], [1], [0, 0, 1, 1], [], []>} : vector<8x128xbf16>, vector<128x128xbf16>, vector<8x128xf32> -> vector<8x128xf32>
    %59 = arith.truncf %58 : vector<8x128xf32> to vector<8x128xbf16>
    %c4_35 = arith.constant 4 : index
    %c0_36 = arith.constant 0 : index
    %c0_37 = arith.constant 0 : index
    %60 = vector.load %arg3[%c4_35, %c0_36, %c0_37] : memref<8x1x128xbf16, #tpu.memory_space<vmem>>, vector<1x1x128xbf16>
    %61 = vector.shape_cast %60 : vector<1x1x128xbf16> to vector<1x128xbf16>
    %62 = vector.broadcast %61 : vector<1x128xbf16> to vector<8x128xbf16>
    %63 = arith.addf %59, %62 : vector<8x128xbf16>
    %cst_38 = arith.constant 2.001950e-01 : bf16
    %64 = vector.broadcast %cst_38 : bf16 to vector<8x128xbf16>
    %65 = arith.mulf %64, %63 : vector<8x128xbf16>
    %66 = arith.maximumf %63, %65 : vector<8x128xbf16>
    %c5 = arith.constant 5 : index
    %c0_39 = arith.constant 0 : index
    %c0_40 = arith.constant 0 : index
    %67 = vector.load %arg2[%c5, %c0_39, %c0_40] : memref<8x128x128xbf16, #tpu.memory_space<vmem>>, vector<1x128x128xbf16>
    %68 = vector.shape_cast %67 : vector<1x128x128xbf16> to vector<128x128xbf16>
    %cst_41 = arith.constant dense<0.000000e+00> : vector<8x128xf32>
    %69 = tpu.matmul %66, %68, %cst_41 {dimension_numbers = #tpu.dot_dimension_numbers<[1], [0], [0], [1], [0, 0, 1, 1], [], []>} : vector<8x128xbf16>, vector<128x128xbf16>, vector<8x128xf32> -> vector<8x128xf32>
    %70 = arith.truncf %69 : vector<8x128xf32> to vector<8x128xbf16>
    %c5_42 = arith.constant 5 : index
    %c0_43 = arith.constant 0 : index
    %c0_44 = arith.constant 0 : index
    %71 = vector.load %arg3[%c5_42, %c0_43, %c0_44] : memref<8x1x128xbf16, #tpu.memory_space<vmem>>, vector<1x1x128xbf16>
    %72 = vector.shape_cast %71 : vector<1x1x128xbf16> to vector<1x128xbf16>
    %73 = vector.broadcast %72 : vector<1x128xbf16> to vector<8x128xbf16>
    %74 = arith.addf %70, %73 : vector<8x128xbf16>
    %cst_45 = arith.constant 2.001950e-01 : bf16
    %75 = vector.broadcast %cst_45 : bf16 to vector<8x128xbf16>
    %76 = arith.mulf %75, %74 : vector<8x128xbf16>
    %77 = arith.maximumf %74, %76 : vector<8x128xbf16>
    %c6 = arith.constant 6 : index
    %c0_46 = arith.constant 0 : index
    %c0_47 = arith.constant 0 : index
    %78 = vector.load %arg2[%c6, %c0_46, %c0_47] : memref<8x128x128xbf16, #tpu.memory_space<vmem>>, vector<1x128x128xbf16>
    %79 = vector.shape_cast %78 : vector<1x128x128xbf16> to vector<128x128xbf16>
    %cst_48 = arith.constant dense<0.000000e+00> : vector<8x128xf32>
    %80 = tpu.matmul %77, %79, %cst_48 {dimension_numbers = #tpu.dot_dimension_numbers<[1], [0], [0], [1], [0, 0, 1, 1], [], []>} : vector<8x128xbf16>, vector<128x128xbf16>, vector<8x128xf32> -> vector<8x128xf32>
    %81 = arith.truncf %80 : vector<8x128xf32> to vector<8x128xbf16>
    %c6_49 = arith.constant 6 : index
    %c0_50 = arith.constant 0 : index
    %c0_51 = arith.constant 0 : index
    %82 = vector.load %arg3[%c6_49, %c0_50, %c0_51] : memref<8x1x128xbf16, #tpu.memory_space<vmem>>, vector<1x1x128xbf16>
    %83 = vector.shape_cast %82 : vector<1x1x128xbf16> to vector<1x128xbf16>
    %84 = vector.broadcast %83 : vector<1x128xbf16> to vector<8x128xbf16>
    %85 = arith.addf %81, %84 : vector<8x128xbf16>
    %cst_52 = arith.constant 2.001950e-01 : bf16
    %86 = vector.broadcast %cst_52 : bf16 to vector<8x128xbf16>
    %87 = arith.mulf %86, %85 : vector<8x128xbf16>
    %88 = arith.maximumf %85, %87 : vector<8x128xbf16>
    %c7 = arith.constant 7 : index
    %c0_53 = arith.constant 0 : index
    %c0_54 = arith.constant 0 : index
    %89 = vector.load %arg2[%c7, %c0_53, %c0_54] : memref<8x128x128xbf16, #tpu.memory_space<vmem>>, vector<1x128x128xbf16>
    %90 = vector.shape_cast %89 : vector<1x128x128xbf16> to vector<128x128xbf16>
    %cst_55 = arith.constant dense<0.000000e+00> : vector<8x128xf32>
    %91 = tpu.matmul %88, %90, %cst_55 {dimension_numbers = #tpu.dot_dimension_numbers<[1], [0], [0], [1], [0, 0, 1, 1], [], []>} : vector<8x128xbf16>, vector<128x128xbf16>, vector<8x128xf32> -> vector<8x128xf32>
    %92 = arith.truncf %91 : vector<8x128xf32> to vector<8x128xbf16>
    %c7_56 = arith.constant 7 : index
    %c0_57 = arith.constant 0 : index
    %c0_58 = arith.constant 0 : index
    %93 = vector.load %arg3[%c7_56, %c0_57, %c0_58] : memref<8x1x128xbf16, #tpu.memory_space<vmem>>, vector<1x1x128xbf16>
    %94 = vector.shape_cast %93 : vector<1x1x128xbf16> to vector<1x128xbf16>
    %95 = vector.broadcast %94 : vector<1x128xbf16> to vector<8x128xbf16>
    %96 = arith.addf %92, %95 : vector<8x128xbf16>
    %cst_59 = arith.constant 2.001950e-01 : bf16
    %97 = vector.broadcast %cst_59 : bf16 to vector<8x128xbf16>
    %98 = arith.mulf %97, %96 : vector<8x128xbf16>
    %99 = arith.maximumf %96, %98 : vector<8x128xbf16>
    %100 = arith.extf %99 : vector<8x128xbf16> to vector<8x128xf32>
    %c0_60 = arith.constant 0 : index
    %c0_61 = arith.constant 0 : index
    %101 = vector.load %arg4[%c0_60, %c0_61] : memref<8x128xf32, #tpu.memory_space<vmem>>, vector<8x128xf32>
    tpu.vector_store %arg4[%c0_60, %c0_61], %100 {strides = array<i32>} : memref<8x128xf32, #tpu.memory_space<vmem>>, vector<8x128xf32>,
    return
  }
  func.func @transform_0(%arg0: i32) -> (i32, i32) {
    %c0_i32 = arith.constant 0 : i32
    %c0_i32_0 = arith.constant 0 : i32
    return %arg0, %c0_i32 : i32, i32
  }
  func.func @transform_1(%arg0: i32) -> (i32, i32, i32) {
    %c0_i32 = arith.constant 0 : i32
    %c0_i32_0 = arith.constant 0 : i32
    %c0_i32_1 = arith.constant 0 : i32
    %c0_i32_2 = arith.constant 0 : i32
    return %c0_i32, %c0_i32_0, %c0_i32_1 : i32, i32, i32
  }
  func.func @transform_2(%arg0: i32) -> (i32, i32, i32) {
    %c0_i32 = arith.constant 0 : i32
    %c0_i32_0 = arith.constant 0 : i32
    %c0_i32_1 = arith.constant 0 : i32
    %c0_i32_2 = arith.constant 0 : i32
    return %c0_i32, %c0_i32_0, %c0_i32_1 : i32, i32, i32
  }
  func.func @transform_3(%arg0: i32) -> (i32, i32) {
    %c0_i32 = arith.constant 0 : i32
    %c0_i32_0 = arith.constant 0 : i32
    return %arg0, %c0_i32 : i32, i32
  }
}

</mosaic_0001>

<llo_original>
// kernel: mapping_forward.1
$region0: #{mapping_forward.1}
  #allocation0 [shape = 'u32[]', space=smem, size = 0x4, offset = 0x4, fixed_abs, tag = 'smem constant byte address 0x4 - core index']
  #allocation1 [shape = 'u32[144,128]{1,0:T(1,128)}', space=vmem, size = 0x12000, scoped, tag = 'internal scratch']
  %s0 = inlined_call_operand.vmem [shape: f32[8,128], index: 0, kind: input, shape index: {}]
  %s1 = inlined_call_operand.hbm [shape: bf16[8,128,128], index: 1, kind: input, shape index: {}]
  %s2 = inlined_call_operand.vmem [shape: bf16[8,1,128], index: 2, kind: input, shape index: {}]
  %s3 = inlined_call_operand.hbm [shape: f32[8,128], index: 3, kind: output, shape index: {}]
  %s4 = sld [smem:[#allocation0]]
  $region26: #{mapping_forward.1} parent=0
    _
  %s6 = ssub.s32 1, %s4
  %s7 = scalar_select 0, %s6, %s4
  $region1: #{mapping_forward.1} parent=0
    #allocation2 [shape = 'u8[262144]{0}', space=vmem, size = 0x40000, scoped, tag = 'input window, operand 1, single buffered']
    #allocation3 [shape = 's32[1]{0}', space=sflag, size = 0x4, scoped, tag = 'scoped memory for mapping_forward.1']
    #allocation4 [shape = 's32[1]{0}', space=sflag, size = 0x4, scoped, tag = 'scoped memory for mapping_forward.1']
    #allocation5 [shape = 'u8[4096]{0}', space=vmem, size = 0x1000, scoped, tag = 'output window, operand 0, single buffered']
    %8 = vsyncpa [#allocation3], 0
    %9 = vsyncpa [#allocation4], 0
    // Predicated region
    $region2: #{mapping_forward.1} parent=1 // pred_check
      _
    $region3: #{mapping_forward.1} parent=1 // pred_check_branch
      %11 = sbr.rel (0) target = $region5
    $region4: #{mapping_forward.1} parent=1 // pred_region
      _
    $region5: #{mapping_forward.1} parent=1 // pred_fallthru
      _
    // Predicated region
    $region6: #{mapping_forward.1} parent=1 // pred_check
      _
    $region7: #{mapping_forward.1} parent=1 // pred_check_branch
      %13 = sbr.rel (0) target = $region9
    $region8: #{mapping_forward.1} parent=1 // pred_region
      %s15 = ssub.s32 8192, 8192
      %16 = vsyncadd [#allocation3], %s15
      %s17 = sshll.u32 [#allocation2], 4
      %s18 = int_to_ptr.vmem [resolvable:$true] %s17
      %23 = dma.hbm_to_vmem [thread:$0]  %s1, 8192, %s18, [#allocation3], 64, 64, 4
    $region9: #{mapping_forward.1} parent=1 // pred_fallthru
      _
    // Predicated region
    $region10: #{mapping_forward.1} parent=1 // pred_check
      _
    $region11: #{mapping_forward.1} parent=1 // pred_check_branch
      %25 = sbr.rel (0) target = $region13
    $region12: #{mapping_forward.1} parent=1 // pred_region
      _
    $region13: #{mapping_forward.1} parent=1 // pred_fallthru
      _
    // Predicated region
    $region14: #{mapping_forward.1} parent=1 // pred_check
      _
    $region15: #{mapping_forward.1} parent=1 // pred_check_branch
      %27 = sbr.rel (0) target = $region17
    $region16: #{mapping_forward.1} parent=1 // pred_region
      %28 = dma.done [#allocation3], 8192
    $region17: #{mapping_forward.1} parent=1 // pred_fallthru
      _
    %v31 = vld [vmem:[%s0] sm:$0xff]
    %v32 = vmul.f32 %v31, %v31
    %33 = vadd.xlane.f32.xlu0 %v32
    %v34 = vpop.xlane.xlu0 %33
    %v35 = vrcp.pop 128.0
    %v36 = vmul.f32 %v34, %v35
    %v37 = vadd.f32 %v36, 1e-08
    %v38 = vrsqrt.pop %v37
    %v39 = vmul.f32 %v31, %v38
    %v40 = vpack.c.bf16 %v39, %v39
    %v41 = vld [vmem:[#allocation2] sm:$0xf]
    %v42 = vld [vmem:[#allocation2 + $0x4] sm:$0xf]
    %v43 = vld [vmem:[#allocation2 + $0x8] sm:$0xf]
    %v44 = vld [vmem:[#allocation2 + $0xc] sm:$0xf]
    %v45 = vld [vmem:[#allocation2 + $0x10] sm:$0xf]
    %v46 = vld [vmem:[#allocation2 + $0x14] sm:$0xf]
    %v47 = vld [vmem:[#allocation2 + $0x18] sm:$0xf]
    %v48 = vld [vmem:[#allocation2 + $0x1c] sm:$0xf]
    %v49 = vld [vmem:[#allocation2 + $0x20] sm:$0xf]
    %v50 = vld [vmem:[#allocation2 + $0x24] sm:$0xf]
    %v51 = vld [vmem:[#allocation2 + $0x28] sm:$0xf]
    %v52 = vld [vmem:[#allocation2 + $0x2c] sm:$0xf]
    %v53 = vld [vmem:[#allocation2 + $0x30] sm:$0xf]
    %v54 = vld [vmem:[#allocation2 + $0x34] sm:$0xf]
    %v55 = vld [vmem:[#allocation2 + $0x38] sm:$0xf]
    %v56 = vld [vmem:[#allocation2 + $0x3c] sm:$0xf]
    %v73 = vunpack.c.l.b16 %v41
    %v74 = vunpack.c.l.b16 %v42
    %v75 = vunpack.c.l.b16 %v43
    %v76 = vunpack.c.l.b16 %v44
    %v77 = vunpack.c.l.b16 %v45
    %v78 = vunpack.c.l.b16 %v46
    %v79 = vunpack.c.l.b16 %v47
    %v80 = vunpack.c.l.b16 %v48
    %v81 = vunpack.c.l.b16 %v49
    %v82 = vunpack.c.l.b16 %v50
    %v83 = vunpack.c.l.b16 %v51
    %v84 = vunpack.c.l.b16 %v52
    %v85 = vunpack.c.l.b16 %v53
    %v86 = vunpack.c.l.b16 %v54
    %v87 = vunpack.c.l.b16 %v55
    %v88 = vunpack.c.l.b16 %v56
    %v89 = vpack.c.b16 %v74, %v73
    %v90 = vpack.c.b16 %v76, %v75
    %v91 = vpack.c.b16 %v78, %v77
    %v92 = vpack.c.b16 %v80, %v79
    %v93 = vpack.c.b16 %v82, %v81
    %v94 = vpack.c.b16 %v84, %v83
    %v95 = vpack.c.b16 %v86, %v85
    %v96 = vpack.c.b16 %v88, %v87
    %105 = vmatprep.subr.bf16.mxu0 0
    %106 = vmatpush1.bf16.msra.mxu0 %v96
    %107 = vmatprep.subr.bf16.mxu0 0
    %108 = vmatpush1.bf16.msra.mxu0 %v95
    %109 = vmatprep.subr.bf16.mxu0 0
    %110 = vmatpush1.bf16.msra.mxu0 %v94
    %111 = vmatprep.subr.bf16.mxu0 0
    %112 = vmatpush1.bf16.msra.mxu0 %v93
    %113 = vmatprep.subr.bf16.mxu0 0
    %114 = vmatpush1.bf16.msra.mxu0 %v92
    %115 = vmatprep.subr.bf16.mxu0 0
    %116 = vmatpush1.bf16.msra.mxu0 %v91
    %117 = vmatprep.subr.bf16.mxu0 0
    %118 = vmatpush1.bf16.msra.mxu0 %v90
    %119 = vmatprep.subr.bf16.mxu0 0
    %120 = vmatpush1.bf16.msra.mxu0 %v89
    %121 = vmatprep.subr.bf16.mxu0 0
    %122 = vmatpush2.bf16.msra.mxu0 0
    %123 = vmatprep.subr.bf16.mxu0 0
    %124 = vmatpush2.bf16.msra.mxu0 0
    %125 = vmatprep.subr.bf16.mxu0 0
    %126 = vmatpush2.bf16.msra.mxu0 0
    %127 = vmatprep.subr.bf16.mxu0 0
    %128 = vmatpush2.bf16.msra.mxu0 0
    %129 = vmatprep.subr.bf16.mxu0 0
    %130 = vmatpush2.bf16.msra.mxu0 0
    %131 = vmatprep.subr.bf16.mxu0 0
    %132 = vmatpush2.bf16.msra.mxu0 0
    %133 = vmatprep.subr.bf16.mxu0 0
    %134 = vmatpush2.bf16.msra.mxu0 0
    %135 = vmatprep.subr.bf16.mxu0 0
    %136 = vmatpush2.bf16.msra.mxu0 0
    %137 = vmatprep.mubr.bf16.mxu0 0
    %138 = vmatmul.mubr.bf16.gmra.mxu0 %v40
    %v139 = vpop.f32.mrf.mxu0
    %v140 = vadd.f32 0.0, %v139
    %v141 = vpop.f32.mrf.mxu0
    %v142 = vpop.f32.mrf.mxu0
    %v143 = vpop.f32.mrf.mxu0
    %144 = vdwg.mxu0
    %v145 = vpack.c.bf16 %v140, %v140
    %v146 = vld [vmem:[%s2] sm:$0x1]
    %v148 = vpack.i.b16 %v146, %v146
    %v150 = vlaneseq
    %v151 = vshrl.u32 %v150, 7
    %v152 = vsub.s32 0, %v151
    %v153 = vrot.slane %v148, %v152
    %v154 = vadd.bf16 %v145, %v153
    %v155 = vmul.bf16 %v154, 1045249613
    %v156 = vmax.bf16 %v154, %v155
    %s157 = scalar_lea.vmem [#allocation2], 64
    %v158 = vld [vmem:[%s157] sm:$0xf]
    %v159 = vld [vmem:[%s157 + $0x4] sm:$0xf]
    %v160 = vld [vmem:[%s157 + $0x8] sm:$0xf]
    %v161 = vld [vmem:[%s157 + $0xc] sm:$0xf]
    %v162 = vld [vmem:[%s157 + $0x10] sm:$0xf]
    %v163 = vld [vmem:[%s157 + $0x14] sm:$0xf]
    %v164 = vld [vmem:[%s157 + $0x18] sm:$0xf]
    %v165 = vld [vmem:[%s157 + $0x1c] sm:$0xf]
    %v166 = vld [vmem:[%s157 + $0x20] sm:$0xf]
    %v167 = vld [vmem:[%s157 + $0x24] sm:$0xf]
    %v168 = vld [vmem:[%s157 + $0x28] sm:$0xf]
    %v169 = vld [vmem:[%s157 + $0x2c] sm:$0xf]
    %v170 = vld [vmem:[%s157 + $0x30] sm:$0xf]
    %v171 = vld [vmem:[%s157 + $0x34] sm:$0xf]
    %v172 = vld [vmem:[%s157 + $0x38] sm:$0xf]
    %v173 = vld [vmem:[%s157 + $0x3c] sm:$0xf]
    %v190 = vunpack.c.l.b16 %v158
    %v191 = vunpack.c.l.b16 %v159
    %v192 = vunpack.c.l.b16 %v160
    %v193 = vunpack.c.l.b16 %v161
    %v194 = vunpack.c.l.b16 %v162
    %v195 = vunpack.c.l.b16 %v163
    %v196 = vunpack.c.l.b16 %v164
    %v197 = vunpack.c.l.b16 %v165
    %v198 = vunpack.c.l.b16 %v166
    %v199 = vunpack.c.l.b16 %v167
    %v200 = vunpack.c.l.b16 %v168
    %v201 = vunpack.c.l.b16 %v169
    %v202 = vunpack.c.l.b16 %v170
    %v203 = vunpack.c.l.b16 %v171
    %v204 = vunpack.c.l.b16 %v172
    %v205 = vunpack.c.l.b16 %v173
    %v206 = vpack.c.b16 %v191, %v190
    %v207 = vpack.c.b16 %v193, %v192
    %v208 = vpack.c.b16 %v195, %v194
    %v209 = vpack.c.b16 %v197, %v196
    %v210 = vpack.c.b16 %v199, %v198
    %v211 = vpack.c.b16 %v201, %v200
    %v212 = vpack.c.b16 %v203, %v202
    %v213 = vpack.c.b16 %v205, %v204
    %222 = vmatprep.subr.bf16.mxu0 0
    %223 = vmatpush1.bf16.msra.mxu0 %v213
    %224 = vmatprep.subr.bf16.mxu0 0
    %225 = vmatpush1.bf16.msra.mxu0 %v212
    %226 = vmatprep.subr.bf16.mxu0 0
    %227 = vmatpush1.bf16.msra.mxu0 %v211
    %228 = vmatprep.subr.bf16.mxu0 0
    %229 = vmatpush1.bf16.msra.mxu0 %v210
    %230 = vmatprep.subr.bf16.mxu0 0
    %231 = vmatpush1.bf16.msra.mxu0 %v209
    %232 = vmatprep.subr.bf16.mxu0 0
    %233 = vmatpush1.bf16.msra.mxu0 %v208
    %234 = vmatprep.subr.bf16.mxu0 0
    %235 = vmatpush1.bf16.msra.mxu0 %v207
    %236 = vmatprep.subr.bf16.mxu0 0
    %237 = vmatpush1.bf16.msra.mxu0 %v206
    %238 = vmatprep.subr.bf16.mxu0 0
    %239 = vmatpush2.bf16.msra.mxu0 0
    %240 = vmatprep.subr.bf16.mxu0 0
    %241 = vmatpush2.bf16.msra.mxu0 0
    %242 = vmatprep.subr.bf16.mxu0 0
    %243 = vmatpush2.bf16.msra.mxu0 0
    %244 = vmatprep.subr.bf16.mxu0 0
    %245 = vmatpush2.bf16.msra.mxu0 0
    %246 = vmatprep.subr.bf16.mxu0 0
    %247 = vmatpush2.bf16.msra.mxu0 0
    %248 = vmatprep.subr.bf16.mxu0 0
    %249 = vmatpush2.bf16.msra.mxu0 0
    %250 = vmatprep.subr.bf16.mxu0 0
    %251 = vmatpush2.bf16.msra.mxu0 0
    %252 = vmatprep.subr.bf16.mxu0 0
    %253 = vmatpush2.bf16.msra.mxu0 0
    %254 = vmatprep.mubr.bf16.mxu0 0
    %255 = vmatmul.mubr.bf16.gmra.mxu0 %v156
    %v256 = vpop.f32.mrf.mxu0
    %v257 = vadd.f32 0.0, %v256
    %v258 = vpop.f32.mrf.mxu0
    %v259 = vpop.f32.mrf.mxu0
    %v260 = vpop.f32.mrf.mxu0
    %261 = vdwg.mxu0
    %v262 = vpack.c.bf16 %v257, %v257
    %s263 = scalar_lea.vmem %s2, 1
    %v264 = vld [vmem:[%s263] sm:$0x1]
    %v266 = vpack.i.b16 %v264, %v264
    %v268 = vlaneseq
    %v269 = vshrl.u32 %v268, 7
    %v270 = vsub.s32 0, %v269
    %v271 = vrot.slane %v266, %v270
    %v272 = vadd.bf16 %v262, %v271
    %v273 = vmul.bf16 %v272, 1045249613
    %v274 = vmax.bf16 %v272, %v273
    %s275 = scalar_lea.vmem [#allocation2], 128
    %v276 = vld [vmem:[%s275] sm:$0xf]
    %v277 = vld [vmem:[%s275 + $0x4] sm:$0xf]
    %v278 = vld [vmem:[%s275 + $0x8] sm:$0xf]
    %v279 = vld [vmem:[%s275 + $0xc] sm:$0xf]
    %v280 = vld [vmem:[%s275 + $0x10] sm:$0xf]
    %v281 = vld [vmem:[%s275 + $0x14] sm:$0xf]
    %v282 = vld [vmem:[%s275 + $0x18] sm:$0xf]
    %v283 = vld [vmem:[%s275 + $0x1c] sm:$0xf]
    %v284 = vld [vmem:[%s275 + $0x20] sm:$0xf]
    %v285 = vld [vmem:[%s275 + $0x24] sm:$0xf]
    %v286 = vld [vmem:[%s275 + $0x28] sm:$0xf]
    %v287 = vld [vmem:[%s275 + $0x2c] sm:$0xf]
    %v288 = vld [vmem:[%s275 + $0x30] sm:$0xf]
    %v289 = vld [vmem:[%s275 + $0x34] sm:$0xf]
    %v290 = vld [vmem:[%s275 + $0x38] sm:$0xf]
    %v291 = vld [vmem:[%s275 + $0x3c] sm:$0xf]
    %v308 = vunpack.c.l.b16 %v276
    %v309 = vunpack.c.l.b16 %v277
    %v310 = vunpack.c.l.b16 %v278
    %v311 = vunpack.c.l.b16 %v279
    %v312 = vunpack.c.l.b16 %v280
    %v313 = vunpack.c.l.b16 %v281
    %v314 = vunpack.c.l.b16 %v282
    %v315 = vunpack.c.l.b16 %v283
    %v316 = vunpack.c.l.b16 %v284
    %v317 = vunpack.c.l.b16 %v285
    %v318 = vunpack.c.l.b16 %v286
    %v319 = vunpack.c.l.b16 %v287
    %v320 = vunpack.c.l.b16 %v288
    %v321 = vunpack.c.l.b16 %v289
    %v322 = vunpack.c.l.b16 %v290
    %v323 = vunpack.c.l.b16 %v291
    %v324 = vpack.c.b16 %v309, %v308
    %v325 = vpack.c.b16 %v311, %v310
    %v326 = vpack.c.b16 %v313, %v312
    %v327 = vpack.c.b16 %v315, %v314
    %v328 = vpack.c.b16 %v317, %v316
    %v329 = vpack.c.b16 %v319, %v318
    %v330 = vpack.c.b16 %v321, %v320
    %v331 = vpack.c.b16 %v323, %v322
    %340 = vmatprep.subr.bf16.mxu0 0
    %341 = vmatpush1.bf16.msra.mxu0 %v331
    %342 = vmatprep.subr.bf16.mxu0 0
    %343 = vmatpush1.bf16.msra.mxu0 %v330
    %344 = vmatprep.subr.bf16.mxu0 0
    %345 = vmatpush1.bf16.msra.mxu0 %v329
    %346 = vmatprep.subr.bf16.mxu0 0
    %347 = vmatpush1.bf16.msra.mxu0 %v328
    %348 = vmatprep.subr.bf16.mxu0 0
    %349 = vmatpush1.bf16.msra.mxu0 %v327
    %350 = vmatprep.subr.bf16.mxu0 0
    %351 = vmatpush1.bf16.msra.mxu0 %v326
    %352 = vmatprep.subr.bf16.mxu0 0
    %353 = vmatpush1.bf16.msra.mxu0 %v325
    %354 = vmatprep.subr.bf16.mxu0 0
    %355 = vmatpush1.bf16.msra.mxu0 %v324
    %356 = vmatprep.subr.bf16.mxu0 0
    %357 = vmatpush2.bf16.msra.mxu0 0
    %358 = vmatprep.subr.bf16.mxu0 0
    %359 = vmatpush2.bf16.msra.mxu0 0
    %360 = vmatprep.subr.bf16.mxu0 0
    %361 = vmatpush2.bf16.msra.mxu0 0
    %362 = vmatprep.subr.bf16.mxu0 0
    %363 = vmatpush2.bf16.msra.mxu0 0
    %364 = vmatprep.subr.bf16.mxu0 0
    %365 = vmatpush2.bf16.msra.mxu0 0
    %366 = vmatprep.subr.bf16.mxu0 0
    %367 = vmatpush2.bf16.msra.mxu0 0
    %368 = vmatprep.subr.bf16.mxu0 0
    %369 = vmatpush2.bf16.msra.mxu0 0
    %370 = vmatprep.subr.bf16.mxu0 0
    %371 = vmatpush2.bf16.msra.mxu0 0
    %372 = vmatprep.mubr.bf16.mxu0 0
    %373 = vmatmul.mubr.bf16.gmra.mxu0 %v274
    %v374 = vpop.f32.mrf.mxu0
    %v375 = vadd.f32 0.0, %v374
    %v376 = vpop.f32.mrf.mxu0
    %v377 = vpop.f32.mrf.mxu0
    %v378 = vpop.f32.mrf.mxu0
    %379 = vdwg.mxu0
    %v380 = vpack.c.bf16 %v375, %v375
    %s381 = scalar_lea.vmem %s2, 2
    %v382 = vld [vmem:[%s381] sm:$0x1]
    %v384 = vpack.i.b16 %v382, %v382
    %v386 = vlaneseq
    %v387 = vshrl.u32 %v386, 7
    %v388 = vsub.s32 0, %v387
    %v389 = vrot.slane %v384, %v388
    %v390 = vadd.bf16 %v380, %v389
    %v391 = vmul.bf16 %v390, 1045249613
    %v392 = vmax.bf16 %v390, %v391
    %s393 = scalar_lea.vmem [#allocation2], 192
    %v394 = vld [vmem:[%s393] sm:$0xf]
    %v395 = vld [vmem:[%s393 + $0x4] sm:$0xf]
    %v396 = vld [vmem:[%s393 + $0x8] sm:$0xf]
    %v397 = vld [vmem:[%s393 + $0xc] sm:$0xf]
    %v398 = vld [vmem:[%s393 + $0x10] sm:$0xf]
    %v399 = vld [vmem:[%s393 + $0x14] sm:$0xf]
    %v400 = vld [vmem:[%s393 + $0x18] sm:$0xf]
    %v401 = vld [vmem:[%s393 + $0x1c] sm:$0xf]
    %v402 = vld [vmem:[%s393 + $0x20] sm:$0xf]
    %v403 = vld [vmem:[%s393 + $0x24] sm:$0xf]
    %v404 = vld [vmem:[%s393 + $0x28] sm:$0xf]
    %v405 = vld [vmem:[%s393 + $0x2c] sm:$0xf]
    %v406 = vld [vmem:[%s393 + $0x30] sm:$0xf]
    %v407 = vld [vmem:[%s393 + $0x34] sm:$0xf]
    %v408 = vld [vmem:[%s393 + $0x38] sm:$0xf]
    %v409 = vld [vmem:[%s393 + $0x3c] sm:$0xf]
    %v426 = vunpack.c.l.b16 %v394
    %v427 = vunpack.c.l.b16 %v395
    %v428 = vunpack.c.l.b16 %v396
    %v429 = vunpack.c.l.b16 %v397
    %v430 = vunpack.c.l.b16 %v398
    %v431 = vunpack.c.l.b16 %v399
    %v432 = vunpack.c.l.b16 %v400
    %v433 = vunpack.c.l.b16 %v401
    %v434 = vunpack.c.l.b16 %v402
    %v435 = vunpack.c.l.b16 %v403
    %v436 = vunpack.c.l.b16 %v404
    %v437 = vunpack.c.l.b16 %v405
    %v438 = vunpack.c.l.b16 %v406
    %v439 = vunpack.c.l.b16 %v407
    %v440 = vunpack.c.l.b16 %v408
    %v441 = vunpack.c.l.b16 %v409
    %v442 = vpack.c.b16 %v427, %v426
    %v443 = vpack.c.b16 %v429, %v428
    %v444 = vpack.c.b16 %v431, %v430
    %v445 = vpack.c.b16 %v433, %v432
    %v446 = vpack.c.b16 %v435, %v434
    %v447 = vpack.c.b16 %v437, %v436
    %v448 = vpack.c.b16 %v439, %v438
    %v449 = vpack.c.b16 %v441, %v440
    %458 = vmatprep.subr.bf16.mxu0 0
    %459 = vmatpush1.bf16.msra.mxu0 %v449
    %460 = vmatprep.subr.bf16.mxu0 0
    %461 = vmatpush1.bf16.msra.mxu0 %v448
    %462 = vmatprep.subr.bf16.mxu0 0
    %463 = vmatpush1.bf16.msra.mxu0 %v447
    %464 = vmatprep.subr.bf16.mxu0 0
    %465 = vmatpush1.bf16.msra.mxu0 %v446
    %466 = vmatprep.subr.bf16.mxu0 0
    %467 = vmatpush1.bf16.msra.mxu0 %v445
    %468 = vmatprep.subr.bf16.mxu0 0
    %469 = vmatpush1.bf16.msra.mxu0 %v444
    %470 = vmatprep.subr.bf16.mxu0 0
    %471 = vmatpush1.bf16.msra.mxu0 %v443
    %472 = vmatprep.subr.bf16.mxu0 0
    %473 = vmatpush1.bf16.msra.mxu0 %v442
    %474 = vmatprep.subr.bf16.mxu0 0
    %475 = vmatpush2.bf16.msra.mxu0 0
    %476 = vmatprep.subr.bf16.mxu0 0
    %477 = vmatpush2.bf16.msra.mxu0 0
    %478 = vmatprep.subr.bf16.mxu0 0
    %479 = vmatpush2.bf16.msra.mxu0 0
    %480 = vmatprep.subr.bf16.mxu0 0
    %481 = vmatpush2.bf16.msra.mxu0 0
    %482 = vmatprep.subr.bf16.mxu0 0
    %483 = vmatpush2.bf16.msra.mxu0 0
    %484 = vmatprep.subr.bf16.mxu0 0
    %485 = vmatpush2.bf16.msra.mxu0 0
    %486 = vmatprep.subr.bf16.mxu0 0
    %487 = vmatpush2.bf16.msra.mxu0 0
    %488 = vmatprep.subr.bf16.mxu0 0
    %489 = vmatpush2.bf16.msra.mxu0 0
    %490 = vmatprep.mubr.bf16.mxu0 0
    %491 = vmatmul.mubr.bf16.gmra.mxu0 %v392
    %v492 = vpop.f32.mrf.mxu0
    %v493 = vadd.f32 0.0, %v492
    %v494 = vpop.f32.mrf.mxu0
    %v495 = vpop.f32.mrf.mxu0
    %v496 = vpop.f32.mrf.mxu0
    %497 = vdwg.mxu0
    %v498 = vpack.c.bf16 %v493, %v493
    %s499 = scalar_lea.vmem %s2, 3
    %v500 = vld [vmem:[%s499] sm:$0x1]
    %v502 = vpack.i.b16 %v500, %v500
    %v504 = vlaneseq
    %v505 = vshrl.u32 %v504, 7
    %v506 = vsub.s32 0, %v505
    %v507 = vrot.slane %v502, %v506
    %v508 = vadd.bf16 %v498, %v507
    %v509 = vmul.bf16 %v508, 1045249613
    %v510 = vmax.bf16 %v508, %v509
    %s511 = scalar_lea.vmem [#allocation2], 256
    %v512 = vld [vmem:[%s511] sm:$0xf]
    %v513 = vld [vmem:[%s511 + $0x4] sm:$0xf]
    %v514 = vld [vmem:[%s511 + $0x8] sm:$0xf]
    %v515 = vld [vmem:[%s511 + $0xc] sm:$0xf]
    %v516 = vld [vmem:[%s511 + $0x10] sm:$0xf]
    %v517 = vld [vmem:[%s511 + $0x14] sm:$0xf]
    %v518 = vld [vmem:[%s511 + $0x18] sm:$0xf]
    %v519 = vld [vmem:[%s511 + $0x1c] sm:$0xf]
    %v520 = vld [vmem:[%s511 + $0x20] sm:$0xf]
    %v521 = vld [vmem:[%s511 + $0x24] sm:$0xf]
    %v522 = vld [vmem:[%s511 + $0x28] sm:$0xf]
    %v523 = vld [vmem:[%s511 + $0x2c] sm:$0xf]
    %v524 = vld [vmem:[%s511 + $0x30] sm:$0xf]
    %v525 = vld [vmem:[%s511 + $0x34] sm:$0xf]
    %v526 = vld [vmem:[%s511 + $0x38] sm:$0xf]
    %v527 = vld [vmem:[%s511 + $0x3c] sm:$0xf]
    %v544 = vunpack.c.l.b16 %v512
    %v545 = vunpack.c.l.b16 %v513
    %v546 = vunpack.c.l.b16 %v514
    %v547 = vunpack.c.l.b16 %v515
    %v548 = vunpack.c.l.b16 %v516
    %v549 = vunpack.c.l.b16 %v517
    %v550 = vunpack.c.l.b16 %v518
    %v551 = vunpack.c.l.b16 %v519
    %v552 = vunpack.c.l.b16 %v520
    %v553 = vunpack.c.l.b16 %v521
    %v554 = vunpack.c.l.b16 %v522
    %v555 = vunpack.c.l.b16 %v523
    %v556 = vunpack.c.l.b16 %v524
    %v557 = vunpack.c.l.b16 %v525
    %v558 = vunpack.c.l.b16 %v526
    %v559 = vunpack.c.l.b16 %v527
    %v560 = vpack.c.b16 %v545, %v544
    %v561 = vpack.c.b16 %v547, %v546
    %v562 = vpack.c.b16 %v549, %v548
    %v563 = vpack.c.b16 %v551, %v550
    %v564 = vpack.c.b16 %v553, %v552
    %v565 = vpack.c.b16 %v555, %v554
    %v566 = vpack.c.b16 %v557, %v556
    %v567 = vpack.c.b16 %v559, %v558
    %576 = vmatprep.subr.bf16.mxu0 0
    %577 = vmatpush1.bf16.msra.mxu0 %v567
    %578 = vmatprep.subr.bf16.mxu0 0
    %579 = vmatpush1.bf16.msra.mxu0 %v566
    %580 = vmatprep.subr.bf16.mxu0 0
    %581 = vmatpush1.bf16.msra.mxu0 %v565
    %582 = vmatprep.subr.bf16.mxu0 0
    %583 = vmatpush1.bf16.msra.mxu0 %v564
    %584 = vmatprep.subr.bf16.mxu0 0
    %585 = vmatpush1.bf16.msra.mxu0 %v563
    %586 = vmatprep.subr.bf16.mxu0 0
    %587 = vmatpush1.bf16.msra.mxu0 %v562
    %588 = vmatprep.subr.bf16.mxu0 0
    %589 = vmatpush1.bf16.msra.mxu0 %v561
    %590 = vmatprep.subr.bf16.mxu0 0
    %591 = vmatpush1.bf16.msra.mxu0 %v560
    %592 = vmatprep.subr.bf16.mxu0 0
    %593 = vmatpush2.bf16.msra.mxu0 0
    %594 = vmatprep.subr.bf16.mxu0 0
    %595 = vmatpush2.bf16.msra.mxu0 0
    %596 = vmatprep.subr.bf16.mxu0 0
    %597 = vmatpush2.bf16.msra.mxu0 0
    %598 = vmatprep.subr.bf16.mxu0 0
    %599 = vmatpush2.bf16.msra.mxu0 0
    %600 = vmatprep.subr.bf16.mxu0 0
    %601 = vmatpush2.bf16.msra.mxu0 0
    %602 = vmatprep.subr.bf16.mxu0 0
    %603 = vmatpush2.bf16.msra.mxu0 0
    %604 = vmatprep.subr.bf16.mxu0 0
    %605 = vmatpush2.bf16.msra.mxu0 0
    %606 = vmatprep.subr.bf16.mxu0 0
    %607 = vmatpush2.bf16.msra.mxu0 0
    %608 = vmatprep.mubr.bf16.mxu0 0
    %609 = vmatmul.mubr.bf16.gmra.mxu0 %v510
    %v610 = vpop.f32.mrf.mxu0
    %v611 = vadd.f32 0.0, %v610
    %v612 = vpop.f32.mrf.mxu0
    %v613 = vpop.f32.mrf.mxu0
    %v614 = vpop.f32.mrf.mxu0
    %615 = vdwg.mxu0
    %v616 = vpack.c.bf16 %v611, %v611
    %s617 = scalar_lea.vmem %s2, 4
    %v618 = vld [vmem:[%s617] sm:$0x1]
    %v620 = vpack.i.b16 %v618, %v618
    %v622 = vlaneseq
    %v623 = vshrl.u32 %v622, 7
    %v624 = vsub.s32 0, %v623
    %v625 = vrot.slane %v620, %v624
    %v626 = vadd.bf16 %v616, %v625
    %v627 = vmul.bf16 %v626, 1045249613
    %v628 = vmax.bf16 %v626, %v627
    %s629 = scalar_lea.vmem [#allocation2], 320
    %v630 = vld [vmem:[%s629] sm:$0xf]
    %v631 = vld [vmem:[%s629 + $0x4] sm:$0xf]
    %v632 = vld [vmem:[%s629 + $0x8] sm:$0xf]
    %v633 = vld [vmem:[%s629 + $0xc] sm:$0xf]
    %v634 = vld [vmem:[%s629 + $0x10] sm:$0xf]
    %v635 = vld [vmem:[%s629 + $0x14] sm:$0xf]
    %v636 = vld [vmem:[%s629 + $0x18] sm:$0xf]
    %v637 = vld [vmem:[%s629 + $0x1c] sm:$0xf]
    %v638 = vld [vmem:[%s629 + $0x20] sm:$0xf]
    %v639 = vld [vmem:[%s629 + $0x24] sm:$0xf]
    %v640 = vld [vmem:[%s629 + $0x28] sm:$0xf]
    %v641 = vld [vmem:[%s629 + $0x2c] sm:$0xf]
    %v642 = vld [vmem:[%s629 + $0x30] sm:$0xf]
    %v643 = vld [vmem:[%s629 + $0x34] sm:$0xf]
    %v644 = vld [vmem:[%s629 + $0x38] sm:$0xf]
    %v645 = vld [vmem:[%s629 + $0x3c] sm:$0xf]
    %v662 = vunpack.c.l.b16 %v630
    %v663 = vunpack.c.l.b16 %v631
    %v664 = vunpack.c.l.b16 %v632
    %v665 = vunpack.c.l.b16 %v633
    %v666 = vunpack.c.l.b16 %v634
    %v667 = vunpack.c.l.b16 %v635
    %v668 = vunpack.c.l.b16 %v636
    %v669 = vunpack.c.l.b16 %v637
    %v670 = vunpack.c.l.b16 %v638
    %v671 = vunpack.c.l.b16 %v639
    %v672 = vunpack.c.l.b16 %v640
    %v673 = vunpack.c.l.b16 %v641
    %v674 = vunpack.c.l.b16 %v642
    %v675 = vunpack.c.l.b16 %v643
    %v676 = vunpack.c.l.b16 %v644
    %v677 = vunpack.c.l.b16 %v645
    %v678 = vpack.c.b16 %v663, %v662
    %v679 = vpack.c.b16 %v665, %v664
    %v680 = vpack.c.b16 %v667, %v666
    %v681 = vpack.c.b16 %v669, %v668
    %v682 = vpack.c.b16 %v671, %v670
    %v683 = vpack.c.b16 %v673, %v672
    %v684 = vpack.c.b16 %v675, %v674
    %v685 = vpack.c.b16 %v677, %v676
    %694 = vmatprep.subr.bf16.mxu0 0
    %695 = vmatpush1.bf16.msra.mxu0 %v685
    %696 = vmatprep.subr.bf16.mxu0 0
    %697 = vmatpush1.bf16.msra.mxu0 %v684
    %698 = vmatprep.subr.bf16.mxu0 0
    %699 = vmatpush1.bf16.msra.mxu0 %v683
    %700 = vmatprep.subr.bf16.mxu0 0
    %701 = vmatpush1.bf16.msra.mxu0 %v682
    %702 = vmatprep.subr.bf16.mxu0 0
    %703 = vmatpush1.bf16.msra.mxu0 %v681
    %704 = vmatprep.subr.bf16.mxu0 0
    %705 = vmatpush1.bf16.msra.mxu0 %v680
    %706 = vmatprep.subr.bf16.mxu0 0
    %707 = vmatpush1.bf16.msra.mxu0 %v679
    %708 = vmatprep.subr.bf16.mxu0 0
    %709 = vmatpush1.bf16.msra.mxu0 %v678
    %710 = vmatprep.subr.bf16.mxu0 0
    %711 = vmatpush2.bf16.msra.mxu0 0
    %712 = vmatprep.subr.bf16.mxu0 0
    %713 = vmatpush2.bf16.msra.mxu0 0
    %714 = vmatprep.subr.bf16.mxu0 0
    %715 = vmatpush2.bf16.msra.mxu0 0
    %716 = vmatprep.subr.bf16.mxu0 0
    %717 = vmatpush2.bf16.msra.mxu0 0
    %718 = vmatprep.subr.bf16.mxu0 0
    %719 = vmatpush2.bf16.msra.mxu0 0
    %720 = vmatprep.subr.bf16.mxu0 0
    %721 = vmatpush2.bf16.msra.mxu0 0
    %722 = vmatprep.subr.bf16.mxu0 0
    %723 = vmatpush2.bf16.msra.mxu0 0
    %724 = vmatprep.subr.bf16.mxu0 0
    %725 = vmatpush2.bf16.msra.mxu0 0
    %726 = vmatprep.mubr.bf16.mxu0 0
    %727 = vmatmul.mubr.bf16.gmra.mxu0 %v628
    %v728 = vpop.f32.mrf.mxu0
    %v729 = vadd.f32 0.0, %v728
    %v730 = vpop.f32.mrf.mxu0
    %v731 = vpop.f32.mrf.mxu0
    %v732 = vpop.f32.mrf.mxu0
    %733 = vdwg.mxu0
    %v734 = vpack.c.bf16 %v729, %v729
    %s735 = scalar_lea.vmem %s2, 5
    %v736 = vld [vmem:[%s735] sm:$0x1]
    %v738 = vpack.i.b16 %v736, %v736
    %v740 = vlaneseq
    %v741 = vshrl.u32 %v740, 7
    %v742 = vsub.s32 0, %v741
    %v743 = vrot.slane %v738, %v742
    %v744 = vadd.bf16 %v734, %v743
    %v745 = vmul.bf16 %v744, 1045249613
    %v746 = vmax.bf16 %v744, %v745
    %s747 = scalar_lea.vmem [#allocation2], 384
    %v748 = vld [vmem:[%s747] sm:$0xf]
    %v749 = vld [vmem:[%s747 + $0x4] sm:$0xf]
    %v750 = vld [vmem:[%s747 + $0x8] sm:$0xf]
    %v751 = vld [vmem:[%s747 + $0xc] sm:$0xf]
    %v752 = vld [vmem:[%s747 + $0x10] sm:$0xf]
    %v753 = vld [vmem:[%s747 + $0x14] sm:$0xf]
    %v754 = vld [vmem:[%s747 + $0x18] sm:$0xf]
    %v755 = vld [vmem:[%s747 + $0x1c] sm:$0xf]
    %v756 = vld [vmem:[%s747 + $0x20] sm:$0xf]
    %v757 = vld [vmem:[%s747 + $0x24] sm:$0xf]
    %v758 = vld [vmem:[%s747 + $0x28] sm:$0xf]
    %v759 = vld [vmem:[%s747 + $0x2c] sm:$0xf]
    %v760 = vld [vmem:[%s747 + $0x30] sm:$0xf]
    %v761 = vld [vmem:[%s747 + $0x34] sm:$0xf]
    %v762 = vld [vmem:[%s747 + $0x38] sm:$0xf]
    %v763 = vld [vmem:[%s747 + $0x3c] sm:$0xf]
    %v780 = vunpack.c.l.b16 %v748
    %v781 = vunpack.c.l.b16 %v749
    %v782 = vunpack.c.l.b16 %v750
    %v783 = vunpack.c.l.b16 %v751
    %v784 = vunpack.c.l.b16 %v752
    %v785 = vunpack.c.l.b16 %v753
    %v786 = vunpack.c.l.b16 %v754
    %v787 = vunpack.c.l.b16 %v755
    %v788 = vunpack.c.l.b16 %v756
    %v789 = vunpack.c.l.b16 %v757
    %v790 = vunpack.c.l.b16 %v758
    %v791 = vunpack.c.l.b16 %v759
    %v792 = vunpack.c.l.b16 %v760
    %v793 = vunpack.c.l.b16 %v761
    %v794 = vunpack.c.l.b16 %v762
    %v795 = vunpack.c.l.b16 %v763
    %v796 = vpack.c.b16 %v781, %v780
    %v797 = vpack.c.b16 %v783, %v782
    %v798 = vpack.c.b16 %v785, %v784
    %v799 = vpack.c.b16 %v787, %v786
    %v800 = vpack.c.b16 %v789, %v788
    %v801 = vpack.c.b16 %v791, %v790
    %v802 = vpack.c.b16 %v793, %v792
    %v803 = vpack.c.b16 %v795, %v794
    %812 = vmatprep.subr.bf16.mxu0 0
    %813 = vmatpush1.bf16.msra.mxu0 %v803
    %814 = vmatprep.subr.bf16.mxu0 0
    %815 = vmatpush1.bf16.msra.mxu0 %v802
    %816 = vmatprep.subr.bf16.mxu0 0
    %817 = vmatpush1.bf16.msra.mxu0 %v801
    %818 = vmatprep.subr.bf16.mxu0 0
    %819 = vmatpush1.bf16.msra.mxu0 %v800
    %820 = vmatprep.subr.bf16.mxu0 0
    %821 = vmatpush1.bf16.msra.mxu0 %v799
    %822 = vmatprep.subr.bf16.mxu0 0
    %823 = vmatpush1.bf16.msra.mxu0 %v798
    %824 = vmatprep.subr.bf16.mxu0 0
    %825 = vmatpush1.bf16.msra.mxu0 %v797
    %826 = vmatprep.subr.bf16.mxu0 0
    %827 = vmatpush1.bf16.msra.mxu0 %v796
    %828 = vmatprep.subr.bf16.mxu0 0
    %829 = vmatpush2.bf16.msra.mxu0 0
    %830 = vmatprep.subr.bf16.mxu0 0
    %831 = vmatpush2.bf16.msra.mxu0 0
    %832 = vmatprep.subr.bf16.mxu0 0
    %833 = vmatpush2.bf16.msra.mxu0 0
    %834 = vmatprep.subr.bf16.mxu0 0
    %835 = vmatpush2.bf16.msra.mxu0 0
    %836 = vmatprep.subr.bf16.mxu0 0
    %837 = vmatpush2.bf16.msra.mxu0 0
    %838 = vmatprep.subr.bf16.mxu0 0
    %839 = vmatpush2.bf16.msra.mxu0 0
    %840 = vmatprep.subr.bf16.mxu0 0
    %841 = vmatpush2.bf16.msra.mxu0 0
    %842 = vmatprep.subr.bf16.mxu0 0
    %843 = vmatpush2.bf16.msra.mxu0 0
    %844 = vmatprep.mubr.bf16.mxu0 0
    %845 = vmatmul.mubr.bf16.gmra.mxu0 %v746
    %v846 = vpop.f32.mrf.mxu0
    %v847 = vadd.f32 0.0, %v846
    %v848 = vpop.f32.mrf.mxu0
    %v849 = vpop.f32.mrf.mxu0
    %v850 = vpop.f32.mrf.mxu0
    %851 = vdwg.mxu0
    %v852 = vpack.c.bf16 %v847, %v847
    %s853 = scalar_lea.vmem %s2, 6
    %v854 = vld [vmem:[%s853] sm:$0x1]
    %v856 = vpack.i.b16 %v854, %v854
    %v858 = vlaneseq
    %v859 = vshrl.u32 %v858, 7
    %v860 = vsub.s32 0, %v859
    %v861 = vrot.slane %v856, %v860
    %v862 = vadd.bf16 %v852, %v861
    %v863 = vmul.bf16 %v862, 1045249613
    %v864 = vmax.bf16 %v862, %v863
    %s865 = scalar_lea.vmem [#allocation2], 448
    %v866 = vld [vmem:[%s865] sm:$0xf]
    %v867 = vld [vmem:[%s865 + $0x4] sm:$0xf]
    %v868 = vld [vmem:[%s865 + $0x8] sm:$0xf]
    %v869 = vld [vmem:[%s865 + $0xc] sm:$0xf]
    %v870 = vld [vmem:[%s865 + $0x10] sm:$0xf]
    %v871 = vld [vmem:[%s865 + $0x14] sm:$0xf]
    %v872 = vld [vmem:[%s865 + $0x18] sm:$0xf]
    %v873 = vld [vmem:[%s865 + $0x1c] sm:$0xf]
    %v874 = vld [vmem:[%s865 + $0x20] sm:$0xf]
    %v875 = vld [vmem:[%s865 + $0x24] sm:$0xf]
    %v876 = vld [vmem:[%s865 + $0x28] sm:$0xf]
    %v877 = vld [vmem:[%s865 + $0x2c] sm:$0xf]
    %v878 = vld [vmem:[%s865 + $0x30] sm:$0xf]
    %v879 = vld [vmem:[%s865 + $0x34] sm:$0xf]
    %v880 = vld [vmem:[%s865 + $0x38] sm:$0xf]
    %v881 = vld [vmem:[%s865 + $0x3c] sm:$0xf]
    %v898 = vunpack.c.l.b16 %v866
    %v899 = vunpack.c.l.b16 %v867
    %v900 = vunpack.c.l.b16 %v868
    %v901 = vunpack.c.l.b16 %v869
    %v902 = vunpack.c.l.b16 %v870
    %v903 = vunpack.c.l.b16 %v871
    %v904 = vunpack.c.l.b16 %v872
    %v905 = vunpack.c.l.b16 %v873
    %v906 = vunpack.c.l.b16 %v874
    %v907 = vunpack.c.l.b16 %v875
    %v908 = vunpack.c.l.b16 %v876
    %v909 = vunpack.c.l.b16 %v877
    %v910 = vunpack.c.l.b16 %v878
    %v911 = vunpack.c.l.b16 %v879
    %v912 = vunpack.c.l.b16 %v880
    %v913 = vunpack.c.l.b16 %v881
    %v914 = vpack.c.b16 %v899, %v898
    %v915 = vpack.c.b16 %v901, %v900
    %v916 = vpack.c.b16 %v903, %v902
    %v917 = vpack.c.b16 %v905, %v904
    %v918 = vpack.c.b16 %v907, %v906
    %v919 = vpack.c.b16 %v909, %v908
    %v920 = vpack.c.b16 %v911, %v910
    %v921 = vpack.c.b16 %v913, %v912
    %930 = vmatprep.subr.bf16.mxu0 0
    %931 = vmatpush1.bf16.msra.mxu0 %v921
    %932 = vmatprep.subr.bf16.mxu0 0
    %933 = vmatpush1.bf16.msra.mxu0 %v920
    %934 = vmatprep.subr.bf16.mxu0 0
    %935 = vmatpush1.bf16.msra.mxu0 %v919
    %936 = vmatprep.subr.bf16.mxu0 0
    %937 = vmatpush1.bf16.msra.mxu0 %v918
    %938 = vmatprep.subr.bf16.mxu0 0
    %939 = vmatpush1.bf16.msra.mxu0 %v917
    %940 = vmatprep.subr.bf16.mxu0 0
    %941 = vmatpush1.bf16.msra.mxu0 %v916
    %942 = vmatprep.subr.bf16.mxu0 0
    %943 = vmatpush1.bf16.msra.mxu0 %v915
    %944 = vmatprep.subr.bf16.mxu0 0
    %945 = vmatpush1.bf16.msra.mxu0 %v914
    %946 = vmatprep.subr.bf16.mxu0 0
    %947 = vmatpush2.bf16.msra.mxu0 0
    %948 = vmatprep.subr.bf16.mxu0 0
    %949 = vmatpush2.bf16.msra.mxu0 0
    %950 = vmatprep.subr.bf16.mxu0 0
    %951 = vmatpush2.bf16.msra.mxu0 0
    %952 = vmatprep.subr.bf16.mxu0 0
    %953 = vmatpush2.bf16.msra.mxu0 0
    %954 = vmatprep.subr.bf16.mxu0 0
    %955 = vmatpush2.bf16.msra.mxu0 0
    %956 = vmatprep.subr.bf16.mxu0 0
    %957 = vmatpush2.bf16.msra.mxu0 0
    %958 = vmatprep.subr.bf16.mxu0 0
    %959 = vmatpush2.bf16.msra.mxu0 0
    %960 = vmatprep.subr.bf16.mxu0 0
    %961 = vmatpush2.bf16.msra.mxu0 0
    %962 = vmatprep.mubr.bf16.mxu0 0
    %963 = vmatmul.mubr.bf16.gmra.mxu0 %v864
    %v964 = vpop.f32.mrf.mxu0
    %v965 = vadd.f32 0.0, %v964
    %v966 = vpop.f32.mrf.mxu0
    %v967 = vpop.f32.mrf.mxu0
    %v968 = vpop.f32.mrf.mxu0
    %969 = vdwg.mxu0
    %v970 = vpack.c.bf16 %v965, %v965
    %s971 = scalar_lea.vmem %s2, 7
    %v972 = vld [vmem:[%s971] sm:$0x1]
    %v974 = vpack.i.b16 %v972, %v972
    %v976 = vlaneseq
    %v977 = vshrl.u32 %v976, 7
    %v978 = vsub.s32 0, %v977
    %v979 = vrot.slane %v974, %v978
    %v980 = vadd.bf16 %v970, %v979
    %v981 = vmul.bf16 %v980, 1045249613
    %v982 = vmax.bf16 %v980, %v981
    %v983 = vunpack.c.l.bf16 %v982
    %984 = vst [vmem:[#allocation5] sm:$0xff] %v983
    // Predicated region
    $region18: #{mapping_forward.1} parent=1 // pred_check
      _
    $region19: #{mapping_forward.1} parent=1 // pred_check_branch
      %986 = sbr.rel (0) target = $region21
    $region20: #{mapping_forward.1} parent=1 // pred_region
      %s988 = ssub.s32 128, 128
      %989 = vsyncadd [#allocation4], %s988
      %s991 = sshll.u32 [#allocation5], 4
      %s992 = int_to_ptr.vmem [resolvable:$true] %s991
      %994 = dma.vmem_to_hbm [thread:$0]  %s992, 128, %s3, [#allocation4]
    $region21: #{mapping_forward.1} parent=1 // pred_fallthru
      _
    // Predicated region
    $region22: #{mapping_forward.1} parent=1 // pred_check
      _
    $region23: #{mapping_forward.1} parent=1 // pred_check_branch
      %996 = sbr.rel (0) target = $region25
    $region24: #{mapping_forward.1} parent=1 // pred_region
      %997 = dma.done [#allocation4], 128
    $region25: #{mapping_forward.1} parent=1 // pred_fallthru
      _
    %998 = vsyncpa [#allocation3], 1
    %999 = vsyncpa [#allocation4], 1

</llo_original>
